<compile_context>
chip_gen: v7x
topology: tpu7x:2x2x1
jax: 0.10.0
libtpu: 0.0.40
codegen_flags: <defaults>
</compile_context>

<pallas_src>
import functools
import math

import jax
import jax.numpy as jnp
from jax.experimental import pallas as pl
from jax.experimental.pallas import tpu as pltpu

OUT_LANES = 128  # lane-dense output slab width


def _gelu_exact(x):
    # torch.nn.GELU() default = exact erf formulation (erf runs on the EUP).
    return 0.5 * x * (1.0 + jax.lax.erf(x * (1.0 / math.sqrt(2.0))))


def _actor_kernel(x_ref, w1_ref, b1_ref, w2_ref, b2_ref,
                  wh_ref, bh_ref, noise_ref, out_ref):
    af = noise_ref.shape[-1]          # A*F  (static)
    out_lanes = out_ref.shape[-1]     # 128  (static)
    tb = x_ref.shape[0]

    x = x_ref[...]

    # trunk: Linear -> GELU -> Linear -> GELU
    h = jnp.dot(x, w1_ref[...], preferred_element_type=jnp.float32) + b1_ref[...]
    h = _gelu_exact(h)
    h = jnp.dot(h, w2_ref[...], preferred_element_type=jnp.float32) + b2_ref[...]
    h = _gelu_exact(h)

    # fused heads: one matmul producing [mu_heads | lnsigma_heads] along lanes
    heads = jnp.dot(h, wh_ref[...], preferred_element_type=jnp.float32) + bh_ref[...]
    mu = jax.nn.sigmoid(heads[:, :af])
    lnsigma = jnp.tanh(heads[:, af:])

    noise = noise_ref[...]

    # reparameterized sample, clipped to [0, 1]
    half_lnsigma = 0.5 * lnsigma
    std = jnp.exp(half_lnsigma)                        # sqrt(exp(lnsigma))
    act = jnp.clip((mu + noise) * std, 0.0, 1.0)

    # log-prob term, then einsum('ijk->i')  (sum over action & freedom dims)
    inv_two_var = 0.5 * jnp.exp(-lnsigma)              # 1 / (2*exp(lnsigma)), no divide
    logp = -half_lnsigma - (act - mu) ** 2 * inv_two_var + 5.0
    logp_sum = jnp.sum(logp, axis=-1, keepdims=True)

    # assemble a full 128-lane slab: [act (af) | logp (1) | zeros] -> one dense store
    pad = jnp.zeros((tb, out_lanes - af - 1), jnp.float32)
    out_ref[...] = jnp.concatenate([act, logp_sum, pad], axis=-1)


def _round_up(n, m):
    return ((n + m - 1) // m) * m


def actor_forward(x, params, noise, action_nums, freedom_nums, block_b=512):
    """x: (B, S) f32; params: dict of pre-transposed weights; noise: (B, A*F)."""
    B, S = x.shape
    AF = action_nums * freedom_nums
    assert AF + 1 <= OUT_LANES

    # Fuse the two head weights/biases along the lane axis (done once, outside
    # the kernel; a few KiB so the concat cost is negligible).
    wh = jnp.concatenate([params["wmu"], params["wsg"]], axis=-1)   # (H, 2*A*F)
    bh = jnp.concatenate([params["bmu"], params["bsg"]], axis=-1)   # (1, 2*A*F)

    # Batch tile: multiple of 8 sublanes, capped so weights + tiles stay tiny in VMEM.
    tB = min(block_b, _round_up(B, 8))
    grid = (pl.cdiv(B, tB),)

    def row_spec(lanes):
        return pl.BlockSpec((tB, lanes), lambda i: (i, 0))

    def const_spec(arr):
        return pl.BlockSpec(arr.shape, lambda i: (0, 0))   # resident across grid steps

    out = pl.pallas_call(
        _actor_kernel,
        out_shape=jax.ShapeDtypeStruct((B, OUT_LANES), jnp.float32),
        grid=grid,
        in_specs=[
            row_spec(S),                                   # x
            const_spec(params["w1"]), const_spec(params["b1"]),
            const_spec(params["w2"]), const_spec(params["b2"]),
            const_spec(wh), const_spec(bh),
            row_spec(AF),                                  # noise
        ],
        out_specs=row_spec(OUT_LANES),
        compiler_params=pltpu.CompilerParams(
            dimension_semantics=("parallel",)),            # 2 TCs on v7x
    )(
        x,
        params["w1"], params["b1"],
        params["w2"], params["b2"],
        wh, bh,
        noise,
    )

    randn_action = out[:, :AF].reshape(B, action_nums, freedom_nums)
    action_log_probability = out[:, AF]
    return randn_action, action_log_probability


def init_params(key, state_nums, hidden_nums, freedom_degree):
    """Deterministic init mimicking torch Linear default (U[-1/sqrt(fan_in), ...]).
    Weights are stored pre-transposed as (in, out) so the kernel does x @ W."""
    A = len(freedom_degree)
    F = freedom_degree[0]
    ks = jax.random.split(key, 8)

    def u(k, shape, fan_in):
        bound = 1.0 / math.sqrt(fan_in)
        return jax.random.uniform(k, shape, jnp.float32, -bound, bound)

    params = {
        "w1": u(ks[0], (state_nums, hidden_nums), state_nums),
        "b1": u(ks[1], (1, hidden_nums), state_nums),
        "w2": u(ks[2], (hidden_nums, hidden_nums), hidden_nums),
        "b2": u(ks[3], (1, hidden_nums), hidden_nums),
        # A heads fused along output (lane) axis: columns [a*F:(a+1)*F] == head a
        "wmu": u(ks[4], (hidden_nums, A * F), hidden_nums),
        "bmu": u(ks[5], (1, A * F), hidden_nums),
        "wsg": u(ks[6], (hidden_nums, A * F), hidden_nums),
        "bsg": u(ks[7], (1, A * F), hidden_nums),
    }
    return params


def _reference_forward(x, params, noise, A, F):
    h = _gelu_exact(jnp.dot(x, params["w1"], preferred_element_type=jnp.float32) + params["b1"])
    h = _gelu_exact(jnp.dot(h, params["w2"], preferred_element_type=jnp.float32) + params["b2"])
    mu = jax.nn.sigmoid(jnp.dot(h, params["wmu"], preferred_element_type=jnp.float32) + params["bmu"])
    ls = jnp.tanh(jnp.dot(h, params["wsg"], preferred_element_type=jnp.float32) + params["bsg"])
    act = jnp.clip((mu + noise) * jnp.sqrt(jnp.exp(ls)), 0.0, 1.0)
    logp = -(ls / 2) - (act - mu) ** 2 / (2 * jnp.exp(ls)) + 5.0
    return act.reshape(x.shape[0], A, F), jnp.sum(logp, axis=-1)


if __name__ == "__main__":
    # Small, forward-consistent shapes.
    B = 8            # batch (multiple of 8 sublanes)
    state_nums = 16
    hidden_nums = 32
    freedom_degree = [4, 4, 4]   # 3 action heads (constrain_action indexes heads 0..2)
    A = len(freedom_degree)
    F = freedom_degree[0]

    key = jax.random.PRNGKey(0)
    k_param, k_x, k_noise = jax.random.split(key, 3)

    params = init_params(k_param, state_nums, hidden_nums, freedom_degree)
    x = jax.random.normal(k_x, (B, state_nums), jnp.float32)
    # torch.randn analog, drawn deterministically in JAX and fed to the kernel.
    noise = jax.random.normal(k_noise, (B, A * F), jnp.float32)

    fwd = jax.jit(functools.partial(actor_forward,
                                    action_nums=A, freedom_nums=F))
    randn_action, action_log_probability = fwd(x, params, noise)
    jax.block_until_ready((randn_action, action_log_probability))

    assert randn_action.shape == (B, A, F)
    assert action_log_probability.shape == (B,)

    ref_act, ref_logp = _reference_forward(x, params, noise, A, F)
    assert jnp.allclose(randn_action, ref_act, rtol=1e-2, atol=1e-2)
    assert jnp.allclose(action_log_probability, ref_logp, rtol=1e-2, atol=1e-2)

    # TODO(synk): constrain_action (softmax / gather post-processing) is not part
    # of forward() and is left to plain JAX if needed.
    print("KERNEL_OK")
</pallas_src>

<mosaic_0001>
module attributes {stable_mosaic.version = 11 : i64} {
  func.func @_actor_kernel(%arg0: i32, %arg1: memref<8x16xf32, #tpu.memory_space<vmem>>, %arg2: memref<16x32xf32, #tpu.memory_space<vmem>>, %arg3: memref<1x32xf32, #tpu.memory_space<vmem>>, %arg4: memref<32x32xf32, #tpu.memory_space<vmem>>, %arg5: memref<1x32xf32, #tpu.memory_space<vmem>>, %arg6: memref<32x24xf32, #tpu.memory_space<vmem>>, %arg7: memref<1x24xf32, #tpu.memory_space<vmem>>, %arg8: memref<8x12xf32, #tpu.memory_space<vmem>>, %arg9: memref<8x128xf32, #tpu.memory_space<vmem>>) attributes {dimension_semantics = [#tpu.dimension_semantics<parallel>], iteration_bounds = array<i64: 1>, scalar_prefetch = 0 : i64, scratch_operands = 0 : i64, tpu.core_type = #tpu.core_type<tc>, window_params = [{transform_indices = @transform_0, window_bounds = array<i64: 8, 16>}, {pipeline_mode = #tpu.pipeline_mode<synchronous>, transform_indices = @transform_1, window_bounds = array<i64: 16, 32>}, {pipeline_mode = #tpu.pipeline_mode<synchronous>, transform_indices = @transform_2, window_bounds = array<i64: 1, 32>}, {pipeline_mode = #tpu.pipeline_mode<synchronous>, transform_indices = @transform_3, window_bounds = array<i64: 32, 32>}, {pipeline_mode = #tpu.pipeline_mode<synchronous>, transform_indices = @transform_4, window_bounds = array<i64: 1, 32>}, {pipeline_mode = #tpu.pipeline_mode<synchronous>, transform_indices = @transform_5, window_bounds = array<i64: 32, 24>}, {pipeline_mode = #tpu.pipeline_mode<synchronous>, transform_indices = @transform_6, window_bounds = array<i64: 1, 24>}, {transform_indices = @transform_7, window_bounds = array<i64: 8, 12>}, {transform_indices = @transform_8, window_bounds = array<i64: 8, 128>}]} {
    %c0 = arith.constant 0 : index
    %c0_0 = arith.constant 0 : index
    %0 = vector.load %arg1[%c0, %c0_0] : memref<8x16xf32, #tpu.memory_space<vmem>>, vector<8x16xf32>
    %c0_1 = arith.constant 0 : index
    %c0_2 = arith.constant 0 : index
    %1 = vector.load %arg2[%c0_1, %c0_2] : memref<16x32xf32, #tpu.memory_space<vmem>>, vector<16x32xf32>
    %cst = arith.constant dense<0.000000e+00> : vector<8x32xf32>
    %2 = tpu.matmul %0, %1, %cst {dimension_numbers = #tpu.dot_dimension_numbers<[1], [0], [0], [1], [0, 0, 1, 1], [], []>} : vector<8x16xf32>, vector<16x32xf32>, vector<8x32xf32> -> vector<8x32xf32>
    %c0_3 = arith.constant 0 : index
    %c0_4 = arith.constant 0 : index
    %3 = vector.load %arg3[%c0_3, %c0_4] : memref<1x32xf32, #tpu.memory_space<vmem>>, vector<1x32xf32>
    %4 = vector.broadcast %3 : vector<1x32xf32> to vector<8x32xf32>
    %5 = arith.addf %2, %4 : vector<8x32xf32>
    %cst_5 = arith.constant 5.000000e-01 : f32
    %6 = vector.broadcast %cst_5 : f32 to vector<8x32xf32>
    %7 = arith.mulf %6, %5 : vector<8x32xf32>
    %cst_6 = arith.constant 0.707106769 : f32
    %8 = vector.broadcast %cst_6 : f32 to vector<8x32xf32>
    %9 = arith.mulf %5, %8 : vector<8x32xf32>
    %10 = math.erf %9 : vector<8x32xf32>
    %cst_7 = arith.constant 1.000000e+00 : f32
    %11 = vector.broadcast %cst_7 : f32 to vector<8x32xf32>
    %12 = arith.addf %11, %10 : vector<8x32xf32>
    %13 = arith.mulf %7, %12 : vector<8x32xf32>
    %c0_8 = arith.constant 0 : index
    %c0_9 = arith.constant 0 : index
    %14 = vector.load %arg4[%c0_8, %c0_9] : memref<32x32xf32, #tpu.memory_space<vmem>>, vector<32x32xf32>
    %cst_10 = arith.constant dense<0.000000e+00> : vector<8x32xf32>
    %15 = tpu.matmul %13, %14, %cst_10 {dimension_numbers = #tpu.dot_dimension_numbers<[1], [0], [0], [1], [0, 0, 1, 1], [], []>} : vector<8x32xf32>, vector<32x32xf32>, vector<8x32xf32> -> vector<8x32xf32>
    %c0_11 = arith.constant 0 : index
    %c0_12 = arith.constant 0 : index
    %16 = vector.load %arg5[%c0_11, %c0_12] : memref<1x32xf32, #tpu.memory_space<vmem>>, vector<1x32xf32>
    %17 = vector.broadcast %16 : vector<1x32xf32> to vector<8x32xf32>
    %18 = arith.addf %15, %17 : vector<8x32xf32>
    %cst_13 = arith.constant 5.000000e-01 : f32
    %19 = vector.broadcast %cst_13 : f32 to vector<8x32xf32>
    %20 = arith.mulf %19, %18 : vector<8x32xf32>
    %cst_14 = arith.constant 0.707106769 : f32
    %21 = vector.broadcast %cst_14 : f32 to vector<8x32xf32>
    %22 = arith.mulf %18, %21 : vector<8x32xf32>
    %23 = math.erf %22 : vector<8x32xf32>
    %cst_15 = arith.constant 1.000000e+00 : f32
    %24 = vector.broadcast %cst_15 : f32 to vector<8x32xf32>
    %25 = arith.addf %24, %23 : vector<8x32xf32>
    %26 = arith.mulf %20, %25 : vector<8x32xf32>
    %c0_16 = arith.constant 0 : index
    %c0_17 = arith.constant 0 : index
    %27 = vector.load %arg6[%c0_16, %c0_17] : memref<32x24xf32, #tpu.memory_space<vmem>>, vector<32x24xf32>
    %cst_18 = arith.constant dense<0.000000e+00> : vector<8x24xf32>
    %28 = tpu.matmul %26, %27, %cst_18 {dimension_numbers = #tpu.dot_dimension_numbers<[1], [0], [0], [1], [0, 0, 1, 1], [], []>} : vector<8x32xf32>, vector<32x24xf32>, vector<8x24xf32> -> vector<8x24xf32>
    %c0_19 = arith.constant 0 : index
    %c0_20 = arith.constant 0 : index
    %29 = vector.load %arg7[%c0_19, %c0_20] : memref<1x24xf32, #tpu.memory_space<vmem>>, vector<1x24xf32>
    %30 = vector.broadcast %29 : vector<1x24xf32> to vector<8x24xf32>
    %31 = arith.addf %28, %30 : vector<8x24xf32>
    %32 = vector.extract_strided_slice %31 {offsets = [0, 0], sizes = [8, 12], strides = [1, 1]} : vector<8x24xf32> to vector<8x12xf32>
    %33 = arith.negf %32 : vector<8x12xf32>
    %34 = math.exp %33 : vector<8x12xf32>
    %cst_21 = arith.constant 1.000000e+00 : f32
    %35 = vector.broadcast %cst_21 : f32 to vector<8x12xf32>
    %36 = arith.addf %35, %34 : vector<8x12xf32>
    %37 = arith.divf %35, %36 : vector<8x12xf32>
    %38 = vector.extract_strided_slice %31 {offsets = [0, 12], sizes = [8, 12], strides = [1, 1]} : vector<8x24xf32> to vector<8x12xf32>
    %39 = math.tanh %38 : vector<8x12xf32>
    %c0_22 = arith.constant 0 : index
    %c0_23 = arith.constant 0 : index
    %40 = vector.load %arg8[%c0_22, %c0_23] : memref<8x12xf32, #tpu.memory_space<vmem>>, vector<8x12xf32>
    %cst_24 = arith.constant 5.000000e-01 : f32
    %41 = vector.broadcast %cst_24 : f32 to vector<8x12xf32>
    %42 = arith.mulf %41, %39 : vector<8x12xf32>
    %43 = math.exp %42 : vector<8x12xf32>
    %44 = arith.addf %37, %40 : vector<8x12xf32>
    %45 = arith.mulf %44, %43 : vector<8x12xf32>
    %cst_25 = arith.constant 0.000000e+00 : f32
    %cst_26 = arith.constant 1.000000e+00 : f32
    %46 = vector.broadcast %cst_25 : f32 to vector<8x12xf32>
    %47 = arith.maximumf %46, %45 : vector<8x12xf32>
    %48 = vector.broadcast %cst_26 : f32 to vector<8x12xf32>
    %49 = arith.minimumf %48, %47 : vector<8x12xf32>
    %cst_27 = arith.constant 0.000000e+00 : f32
    %50 = vector.broadcast %cst_27 : f32 to vector<8x12xf32>
    %51 = arith.subf %50, %39 : vector<8x12xf32>
    %52 = math.exp %51 : vector<8x12xf32>
    %cst_28 = arith.constant 5.000000e-01 : f32
    %53 = vector.broadcast %cst_28 : f32 to vector<8x12xf32>
    %54 = arith.mulf %53, %52 : vector<8x12xf32>
    %cst_29 = arith.constant 0.000000e+00 : f32
    %55 = vector.broadcast %cst_29 : f32 to vector<8x12xf32>
    %56 = arith.subf %55, %42 : vector<8x12xf32>
    %57 = arith.subf %49, %37 : vector<8x12xf32>
    %58 = arith.mulf %57, %57 : vector<8x12xf32>
    %59 = arith.mulf %58, %54 : vector<8x12xf32>
    %60 = arith.subf %56, %59 : vector<8x12xf32>
    %cst_30 = arith.constant 5.000000e+00 : f32
    %61 = vector.broadcast %cst_30 : f32 to vector<8x12xf32>
    %62 = arith.addf %60, %61 : vector<8x12xf32>
    %cst_31 = arith.constant dense<0.000000e+00> : vector<8xf32>
    %63 = vector.multi_reduction <add>, %62, %cst_31 [1] : vector<8x12xf32> to vector<8xf32>
    %64 = vector.shape_cast %63 : vector<8xf32> to vector<8x1xf32>
    %cst_32 = arith.constant 0.000000e+00 : f32
    %65 = vector.broadcast %cst_32 : f32 to vector<8x115xf32>
    %66 = tpu.concatenate %49, %64, %65 in 1 : vector<8x12xf32>, vector<8x1xf32>, vector<8x115xf32> -> vector<8x128xf32>
    %c0_33 = arith.constant 0 : index
    %c0_34 = arith.constant 0 : index
    %67 = vector.load %arg9[%c0_33, %c0_34] : memref<8x128xf32, #tpu.memory_space<vmem>>, vector<8x128xf32>
    tpu.vector_store %arg9[%c0_33, %c0_34], %66 {strides = array<i32>} : memref<8x128xf32, #tpu.memory_space<vmem>>, vector<8x128xf32>,
    return
  }
  func.func @transform_0(%arg0: i32) -> (i32, i32) {
    %c0_i32 = arith.constant 0 : i32
    %c0_i32_0 = arith.constant 0 : i32
    return %arg0, %c0_i32 : i32, i32
  }
  func.func @transform_1(%arg0: i32) -> (i32, i32) {
    %c0_i32 = arith.constant 0 : i32
    %c0_i32_0 = arith.constant 0 : i32
    %c0_i32_1 = arith.constant 0 : i32
    return %c0_i32, %c0_i32_0 : i32, i32
  }
  func.func @transform_2(%arg0: i32) -> (i32, i32) {
    %c0_i32 = arith.constant 0 : i32
    %c0_i32_0 = arith.constant 0 : i32
    %c0_i32_1 = arith.constant 0 : i32
    return %c0_i32, %c0_i32_0 : i32, i32
  }
  func.func @transform_3(%arg0: i32) -> (i32, i32) {
    %c0_i32 = arith.constant 0 : i32
    %c0_i32_0 = arith.constant 0 : i32
    %c0_i32_1 = arith.constant 0 : i32
    return %c0_i32, %c0_i32_0 : i32, i32
  }
  func.func @transform_4(%arg0: i32) -> (i32, i32) {
    %c0_i32 = arith.constant 0 : i32
    %c0_i32_0 = arith.constant 0 : i32
    %c0_i32_1 = arith.constant 0 : i32
    return %c0_i32, %c0_i32_0 : i32, i32
  }
  func.func @transform_5(%arg0: i32) -> (i32, i32) {
    %c0_i32 = arith.constant 0 : i32
    %c0_i32_0 = arith.constant 0 : i32
    %c0_i32_1 = arith.constant 0 : i32
    return %c0_i32, %c0_i32_0 : i32, i32
  }
  func.func @transform_6(%arg0: i32) -> (i32, i32) {
    %c0_i32 = arith.constant 0 : i32
    %c0_i32_0 = arith.constant 0 : i32
    %c0_i32_1 = arith.constant 0 : i32
    return %c0_i32, %c0_i32_0 : i32, i32
  }
  func.func @transform_7(%arg0: i32) -> (i32, i32) {
    %c0_i32 = arith.constant 0 : i32
    %c0_i32_0 = arith.constant 0 : i32
    return %arg0, %c0_i32 : i32, i32
  }
  func.func @transform_8(%arg0: i32) -> (i32, i32) {
    %c0_i32 = arith.constant 0 : i32
    %c0_i32_0 = arith.constant 0 : i32
    return %arg0, %c0_i32 : i32, i32
  }
}

</mosaic_0001>

<llo_original>
// kernel: actor_forward.1
$region0: #{actor_forward.1}
  #allocation0 [shape = 'u32[]', space=smem, size = 0x4, offset = 0x4, fixed_abs, tag = 'smem constant byte address 0x4 - core index']
  #allocation1 [shape = 'u32[144,128]{1,0:T(1,128)}', space=vmem, size = 0x12000, scoped, tag = 'internal scratch']
  %s0 = inlined_call_operand.vmem [shape: f32[8,16], index: 0, kind: input, shape index: {}]
  %s1 = inlined_call_operand.vmem [shape: f32[16,32], index: 1, kind: input, shape index: {}]
  %s2 = inlined_call_operand.vmem [shape: f32[1,32], index: 2, kind: input, shape index: {}]
  %s3 = inlined_call_operand.vmem [shape: f32[32,32], index: 3, kind: input, shape index: {}]
  %s4 = inlined_call_operand.vmem [shape: f32[1,32], index: 4, kind: input, shape index: {}]
  %s5 = inlined_call_operand.vmem [shape: f32[32,24], index: 5, kind: input, shape index: {}]
  %s6 = inlined_call_operand.vmem [shape: f32[1,24], index: 6, kind: input, shape index: {}]
  %s7 = inlined_call_operand.vmem [shape: f32[8,12], index: 7, kind: input, shape index: {}]
  %s8 = inlined_call_operand.vmem [shape: f32[8,128], index: 8, kind: output, shape index: {}]
  %s9 = sld [smem:[#allocation0]]
  $region42: #{actor_forward.1} parent=0
    _
  %s11 = ssub.s32 1, %s9
  %s12 = scalar_select 0, %s11, %s9
  // Predicated region
  $region2: #{actor_forward.1} parent=0 // pred_check
    _
  $region3: #{actor_forward.1} parent=0 // pred_check_branch
    %14 = sbr.rel (0) target = $region5
  $region4: #{actor_forward.1} parent=0 // pred_region
    _
  $region5: #{actor_forward.1} parent=0 // pred_fallthru
    _
  // Predicated region
  $region6: #{actor_forward.1} parent=0 // pred_check
    _
  $region7: #{actor_forward.1} parent=0 // pred_check_branch
    %16 = sbr.rel (0) target = $region9
  $region8: #{actor_forward.1} parent=0 // pred_region
    _
  $region9: #{actor_forward.1} parent=0 // pred_fallthru
    _
  // Predicated region
  $region10: #{actor_forward.1} parent=0 // pred_check
    _
  $region11: #{actor_forward.1} parent=0 // pred_check_branch
    %18 = sbr.rel (0) target = $region13
  $region12: #{actor_forward.1} parent=0 // pred_region
    _
  $region13: #{actor_forward.1} parent=0 // pred_fallthru
    _
  // Predicated region
  $region14: #{actor_forward.1} parent=0 // pred_check
    _
  $region15: #{actor_forward.1} parent=0 // pred_check_branch
    %20 = sbr.rel (0) target = $region17
  $region16: #{actor_forward.1} parent=0 // pred_region
    _
  $region17: #{actor_forward.1} parent=0 // pred_fallthru
    _
  // Predicated region
  $region18: #{actor_forward.1} parent=0 // pred_check
    _
  $region19: #{actor_forward.1} parent=0 // pred_check_branch
    %22 = sbr.rel (0) target = $region21
  $region20: #{actor_forward.1} parent=0 // pred_region
    _
  $region21: #{actor_forward.1} parent=0 // pred_fallthru
    _
  // Predicated region
  $region22: #{actor_forward.1} parent=0 // pred_check
    _
  $region23: #{actor_forward.1} parent=0 // pred_check_branch
    %24 = sbr.rel (0) target = $region25
  $region24: #{actor_forward.1} parent=0 // pred_region
    _
  $region25: #{actor_forward.1} parent=0 // pred_fallthru
    _
  // Predicated region
  $region26: #{actor_forward.1} parent=0 // pred_check
    _
  $region27: #{actor_forward.1} parent=0 // pred_check_branch
    %26 = sbr.rel (0) target = $region29
  $region28: #{actor_forward.1} parent=0 // pred_region
    _
  $region29: #{actor_forward.1} parent=0 // pred_fallthru
    _
  // Predicated region
  $region30: #{actor_forward.1} parent=0 // pred_check
    _
  $region31: #{actor_forward.1} parent=0 // pred_check_branch
    %28 = sbr.rel (0) target = $region33
  $region32: #{actor_forward.1} parent=0 // pred_region
    _
  $region33: #{actor_forward.1} parent=0 // pred_fallthru
    _
  %v29 = vld [vmem:[%s0] sm:$0xff]
  %v30 = vld [vmem:[%s1] sm:$0xff]
  %v31 = vld [vmem:[%s1 + $0x8] sm:$0xff]
  %v32 = vld [vmem:[%s2] sm:$0x1]
  %v34 = vlaneseq
  %v35 = vshrl.u32 %v34, 7
  %v36 = vsub.s32 0, %v35
  %v37 = vrot.slane %v32, %v36
  %vm39 = vcmask 130048
  %v41 = vsel %vm39, %v29, 0
  %43 = vmatprep.subr.mxu0 0.0
  %44 = vmatpush1.msra.mxu0 %v30
  %45 = vmatprep.subr.mxu0 0.0
  %46 = vmatpush1.msra.mxu0 %v31
  %47 = vmatprep.subr.mxu0 0.0
  %48 = vmatpush1.msra.mxu0 0.0
  %49 = vmatprep.subr.mxu0 0.0
  %50 = vmatpush1.msra.mxu0 0.0
  %51 = vmatprep.subr.mxu0 0.0
  %52 = vmatpush1.msra.mxu0 0.0
  %53 = vmatprep.subr.mxu0 0.0
  %54 = vmatpush1.msra.mxu0 0.0
  %55 = vmatprep.subr.mxu0 0.0
  %56 = vmatpush1.msra.mxu0 0.0
  %57 = vmatprep.subr.mxu0 0.0
  %58 = vmatpush1.msra.mxu0 0.0
  %59 = vmatprep.subr.mxu0 0.0
  %60 = vmatpush1.msra.mxu0 0.0
  %61 = vmatprep.subr.mxu0 0.0
  %62 = vmatpush1.msra.mxu0 0.0
  %63 = vmatprep.subr.mxu0 0.0
  %64 = vmatpush1.msra.mxu0 0.0
  %65 = vmatprep.subr.mxu0 0.0
  %66 = vmatpush1.msra.mxu0 0.0
  %67 = vmatprep.subr.mxu0 0.0
  %68 = vmatpush1.msra.mxu0 0.0
  %69 = vmatprep.subr.mxu0 0.0
  %70 = vmatpush1.msra.mxu0 0.0
  %71 = vmatprep.subr.mxu0 0.0
  %72 = vmatpush1.msra.mxu0 0.0
  %73 = vmatprep.subr.mxu0 0.0
  %74 = vmatpush1.msra.mxu0 0.0
  %75 = vmatprep.subr.mxu0 0.0
  %76 = vmatpush1.msra.mxu0 0.0
  %77 = vmatprep.subr.mxu0 0.0
  %78 = vmatpush1.msra.mxu0 0.0
  %79 = vmatprep.subr.mxu0 0.0
  %80 = vmatpush1.msra.mxu0 0.0
  %81 = vmatprep.subr.mxu0 0.0
  %82 = vmatpush1.msra.mxu0 0.0
  %83 = vmatprep.subr.mxu0 0.0
  %84 = vmatpush1.msra.mxu0 0.0
  %85 = vmatprep.subr.mxu0 0.0
  %86 = vmatpush1.msra.mxu0 0.0
  %87 = vmatprep.subr.mxu0 0.0
  %88 = vmatpush1.msra.mxu0 0.0
  %89 = vmatprep.subr.mxu0 0.0
  %90 = vmatpush1.msra.mxu0 0.0
  %91 = vmatprep.subr.mxu0 0.0
  %92 = vmatpush1.msra.mxu0 0.0
  %93 = vmatprep.subr.mxu0 0.0
  %94 = vmatpush1.msra.mxu0 0.0
  %95 = vmatprep.subr.mxu0 0.0
  %96 = vmatpush1.msra.mxu0 0.0
  %97 = vmatprep.subr.mxu0 0.0
  %98 = vmatpush1.msra.mxu0 0.0
  %99 = vmatprep.subr.mxu0 0.0
  %100 = vmatpush1.msra.mxu0 0.0
  %101 = vmatprep.subr.mxu0 0.0
  %102 = vmatpush1.msra.mxu0 0.0
  %103 = vmatprep.subr.mxu0 0.0
  %104 = vmatpush1.msra.mxu0 0.0
  %105 = vmatprep.subr.mxu0 0.0
  %106 = vmatpush1.msra.mxu0 0.0
  %107 = vmatprep.mubr.f32.mxu0 0.0
  %108 = vmatmul.mubr.f32.gmra.mrb[0].mxu0 %v41
  %v109 = vpop.f32.mrb[0].mxu0
  %v110 = vadd.f32 %v37, %v109
  %v111 = vpop.f32.mrb[0].mxu0
  %112 = vdwg.mxu0
  %v113 = vmul.f32 %v110, 0.5
  %v114 = vmul.f32 %v110, 0.70710677
  %v115 = verf.f32.pop %v114
  %v116 = vadd.f32 %v115, 1.0
  %v117 = vmul.f32 %v113, %v116
  %v118 = vld [vmem:[%s3] sm:$0xff]
  %v119 = vld [vmem:[%s3 + $0x8] sm:$0xff]
  %v120 = vld [vmem:[%s3 + $0x10] sm:$0xff]
  %v121 = vld [vmem:[%s3 + $0x18] sm:$0xff]
  %v122 = vld [vmem:[%s4] sm:$0x1]
  %v124 = vlaneseq
  %v125 = vshrl.u32 %v124, 7
  %v126 = vsub.s32 0, %v125
  %v127 = vrot.slane %v122, %v126
  %vm129 = vcmask 261120
  %v131 = vsel %vm129, %v117, 0
  %133 = vmatprep.subr.mxu0 0.0
  %134 = vmatpush1.msra.mxu0 %v118
  %135 = vmatprep.subr.mxu0 0.0
  %136 = vmatpush1.msra.mxu0 %v119
  %137 = vmatprep.subr.mxu0 0.0
  %138 = vmatpush1.msra.mxu0 %v120
  %139 = vmatprep.subr.mxu0 0.0
  %140 = vmatpush1.msra.mxu0 %v121
  %141 = vmatprep.subr.mxu0 0.0
  %142 = vmatpush1.msra.mxu0 0.0
  %143 = vmatprep.subr.mxu0 0.0
  %144 = vmatpush1.msra.mxu0 0.0
  %145 = vmatprep.subr.mxu0 0.0
  %146 = vmatpush1.msra.mxu0 0.0
  %147 = vmatprep.subr.mxu0 0.0
  %148 = vmatpush1.msra.mxu0 0.0
  %149 = vmatprep.subr.mxu0 0.0
  %150 = vmatpush1.msra.mxu0 0.0
  %151 = vmatprep.subr.mxu0 0.0
  %152 = vmatpush1.msra.mxu0 0.0
  %153 = vmatprep.subr.mxu0 0.0
  %154 = vmatpush1.msra.mxu0 0.0
  %155 = vmatprep.subr.mxu0 0.0
  %156 = vmatpush1.msra.mxu0 0.0
  %157 = vmatprep.subr.mxu0 0.0
  %158 = vmatpush1.msra.mxu0 0.0
  %159 = vmatprep.subr.mxu0 0.0
  %160 = vmatpush1.msra.mxu0 0.0
  %161 = vmatprep.subr.mxu0 0.0
  %162 = vmatpush1.msra.mxu0 0.0
  %163 = vmatprep.subr.mxu0 0.0
  %164 = vmatpush1.msra.mxu0 0.0
  %165 = vmatprep.subr.mxu0 0.0
  %166 = vmatpush1.msra.mxu0 0.0
  %167 = vmatprep.subr.mxu0 0.0
  %168 = vmatpush1.msra.mxu0 0.0
  %169 = vmatprep.subr.mxu0 0.0
  %170 = vmatpush1.msra.mxu0 0.0
  %171 = vmatprep.subr.mxu0 0.0
  %172 = vmatpush1.msra.mxu0 0.0
  %173 = vmatprep.subr.mxu0 0.0
  %174 = vmatpush1.msra.mxu0 0.0
  %175 = vmatprep.subr.mxu0 0.0
  %176 = vmatpush1.msra.mxu0 0.0
  %177 = vmatprep.subr.mxu0 0.0
  %178 = vmatpush1.msra.mxu0 0.0
  %179 = vmatprep.subr.mxu0 0.0
  %180 = vmatpush1.msra.mxu0 0.0
  %181 = vmatprep.subr.mxu0 0.0
  %182 = vmatpush1.msra.mxu0 0.0
  %183 = vmatprep.subr.mxu0 0.0
  %184 = vmatpush1.msra.mxu0 0.0
  %185 = vmatprep.subr.mxu0 0.0
  %186 = vmatpush1.msra.mxu0 0.0
  %187 = vmatprep.subr.mxu0 0.0
  %188 = vmatpush1.msra.mxu0 0.0
  %189 = vmatprep.subr.mxu0 0.0
  %190 = vmatpush1.msra.mxu0 0.0
  %191 = vmatprep.subr.mxu0 0.0
  %192 = vmatpush1.msra.mxu0 0.0
  %193 = vmatprep.subr.mxu0 0.0
  %194 = vmatpush1.msra.mxu0 0.0
  %195 = vmatprep.subr.mxu0 0.0
  %196 = vmatpush1.msra.mxu0 0.0
  %197 = vmatprep.mubr.f32.mxu0 0.0
  %198 = vmatmul.mubr.f32.gmra.mrb[0].mxu0 %v131
  %v199 = vpop.f32.mrb[0].mxu0
  %v200 = vadd.f32 %v127, %v199
  %v201 = vpop.f32.mrb[0].mxu0
  %202 = vdwg.mxu0
  %v203 = vmul.f32 %v200, 0.5
  %v204 = vmul.f32 %v200, 0.70710677
  %v205 = verf.f32.pop %v204
  %v206 = vadd.f32 %v205, 1.0
  %v207 = vmul.f32 %v203, %v206
  %v208 = vld [vmem:[%s5] sm:$0xff]
  %v209 = vld [vmem:[%s5 + $0x8] sm:$0xff]
  %v210 = vld [vmem:[%s5 + $0x10] sm:$0xff]
  %v211 = vld [vmem:[%s5 + $0x18] sm:$0xff]
  %v212 = vld [vmem:[%s6] sm:$0x1]
  %v214 = vlaneseq
  %v215 = vshrl.u32 %v214, 7
  %v216 = vsub.s32 0, %v215
  %v217 = vrot.slane %v212, %v216
  %v220 = vsel %vm129, %v207, 0
  %222 = vmatprep.subr.mxu0 0.0
  %223 = vmatpush1.msra.mxu0 %v208
  %224 = vmatprep.subr.mxu0 0.0
  %225 = vmatpush1.msra.mxu0 %v209
  %226 = vmatprep.subr.mxu0 0.0
  %227 = vmatpush1.msra.mxu0 %v210
  %228 = vmatprep.subr.mxu0 0.0
  %229 = vmatpush1.msra.mxu0 %v211
  %230 = vmatprep.subr.mxu0 0.0
  %231 = vmatpush1.msra.mxu0 0.0
  %232 = vmatprep.subr.mxu0 0.0
  %233 = vmatpush1.msra.mxu0 0.0
  %234 = vmatprep.subr.mxu0 0.0
  %235 = vmatpush1.msra.mxu0 0.0
  %236 = vmatprep.subr.mxu0 0.0
  %237 = vmatpush1.msra.mxu0 0.0
  %238 = vmatprep.subr.mxu0 0.0
  %239 = vmatpush1.msra.mxu0 0.0
  %240 = vmatprep.subr.mxu0 0.0
  %241 = vmatpush1.msra.mxu0 0.0
  %242 = vmatprep.subr.mxu0 0.0
  %243 = vmatpush1.msra.mxu0 0.0
  %244 = vmatprep.subr.mxu0 0.0
  %245 = vmatpush1.msra.mxu0 0.0
  %246 = vmatprep.subr.mxu0 0.0
  %247 = vmatpush1.msra.mxu0 0.0
  %248 = vmatprep.subr.mxu0 0.0
  %249 = vmatpush1.msra.mxu0 0.0
  %250 = vmatprep.subr.mxu0 0.0
  %251 = vmatpush1.msra.mxu0 0.0
  %252 = vmatprep.subr.mxu0 0.0
  %253 = vmatpush1.msra.mxu0 0.0
  %254 = vmatprep.subr.mxu0 0.0
  %255 = vmatpush1.msra.mxu0 0.0
  %256 = vmatprep.subr.mxu0 0.0
  %257 = vmatpush1.msra.mxu0 0.0
  %258 = vmatprep.subr.mxu0 0.0
  %259 = vmatpush1.msra.mxu0 0.0
  %260 = vmatprep.subr.mxu0 0.0
  %261 = vmatpush1.msra.mxu0 0.0
  %262 = vmatprep.subr.mxu0 0.0
  %263 = vmatpush1.msra.mxu0 0.0
  %264 = vmatprep.subr.mxu0 0.0
  %265 = vmatpush1.msra.mxu0 0.0
  %266 = vmatprep.subr.mxu0 0.0
  %267 = vmatpush1.msra.mxu0 0.0
  %268 = vmatprep.subr.mxu0 0.0
  %269 = vmatpush1.msra.mxu0 0.0
  %270 = vmatprep.subr.mxu0 0.0
  %271 = vmatpush1.msra.mxu0 0.0
  %272 = vmatprep.subr.mxu0 0.0
  %273 = vmatpush1.msra.mxu0 0.0
  %274 = vmatprep.subr.mxu0 0.0
  %275 = vmatpush1.msra.mxu0 0.0
  %276 = vmatprep.subr.mxu0 0.0
  %277 = vmatpush1.msra.mxu0 0.0
  %278 = vmatprep.subr.mxu0 0.0
  %279 = vmatpush1.msra.mxu0 0.0
  %280 = vmatprep.subr.mxu0 0.0
  %281 = vmatpush1.msra.mxu0 0.0
  %282 = vmatprep.subr.mxu0 0.0
  %283 = vmatpush1.msra.mxu0 0.0
  %284 = vmatprep.subr.mxu0 0.0
  %285 = vmatpush1.msra.mxu0 0.0
  %286 = vmatprep.mubr.f32.mxu0 0.0
  %287 = vmatmul.mubr.f32.gmra.mrb[0].mxu0 %v220
  %v288 = vpop.f32.mrb[0].mxu0
  %v289 = vadd.f32 %v217, %v288
  %v290 = vpop.f32.mrb[0].mxu0
  %291 = vdwg.mxu0
  %v292 = vxor.u32 %v289, 2147483648
  %v293 = vmul.f32 %v292, 1.442695
  %v294 = vpow.pop %v293
  %v295 = vadd.f32 %v294, 1.0
  %v296 = vrcp.pop %v295
  %v297 = vmul.f32 1.0, %v296
  %v298 = vtanh.pop %v289
  %v299 = vld [vmem:[%s7] sm:$0xff]
  %v300 = vmul.f32 %v298, 0.5
  %v301 = vmul.f32 %v300, 1.442695
  %v302 = vpow.pop %v301
  %v303 = vadd.f32 %v297, %v299
  %305 = vrot.lane.b32.xlu0 %v302, 116
  %v306 = vpop.permute.xlu0 %305
  %v308 = vmul.f32 %v303, %v306
  %v309 = vmax.f32 %v308, 0.0
  %v310 = vmin.f32 %v309, 1.0
  %v311 = vsub.f32 0.0, %v298
  %v312 = vmul.f32 %v311, 1.442695
  %v313 = vpow.pop %v312
  %v314 = vmul.f32 %v313, 0.5
  %v315 = vsub.f32 0.0, %v300
  %v316 = vsub.f32 %v310, %v297
  %v317 = vmul.f32 %v316, %v316
  %319 = vrot.lane.b32.xlu0 %v314, 116
  %v320 = vpop.permute.xlu0 %319
  %v322 = vmul.f32 %v317, %v320
  %324 = vrot.lane.b32.xlu0 %v322, 12
  %v325 = vpop.permute.xlu0 %324
  %v327 = vsub.f32 %v315, %v325
  %v328 = vadd.f32 %v327, 5.0
  %330 = vrot.lane.b32.xlu0 %v328, 116
  %v331 = vpop.permute.xlu0 %330
  %vm333 = vcmask 97280
  %v334 = vsel %vm333, %v331, 0.0
  %335 = vadd.xlane.f32.xlu0 %v334
  %v336 = vpop.xlane.xlu0 %335
  %v337 = vsel %vm333, %v310, %v336
  %vm338 = vcmask 105472
  %v339 = vsel %vm338, %v337, 0.0
  %340 = vst [vmem:[%s8] sm:$0xff] %v339
  // Predicated region
  $region34: #{actor_forward.1} parent=0 // pred_check
    _
  $region35: #{actor_forward.1} parent=0 // pred_check_branch
    %342 = sbr.rel (0) target = $region37
  $region36: #{actor_forward.1} parent=0 // pred_region
    _
  $region37: #{actor_forward.1} parent=0 // pred_fallthru
    _
  // Predicated region
  $region38: #{actor_forward.1} parent=0 // pred_check
    _
  $region39: #{actor_forward.1} parent=0 // pred_check_branch
    %344 = sbr.rel (0) target = $region41
  $region40: #{actor_forward.1} parent=0 // pred_region
    _
  $region41: #{actor_forward.1} parent=0 // pred_fallthru
    _

</llo_original>
